<compile_context>
chip_gen: v7x
topology: tpu7x:2x2x1
jax: 0.10.0
libtpu: 0.0.40
codegen_flags: <defaults>
</compile_context>

<pallas_src>
import jax
import jax.numpy as jnp
import numpy as np
from jax.experimental import pallas as pl
from jax.experimental.pallas import tpu as pltpu

EPS = 1e-5


def simple_cnn_kernel(xc_ref,    # (TB, L, K)     im2col'd, pre-padded input
                      w1_ref,    # (K, C1)        conv1 weight, BN1 folded in
                      w2_ref,    # (K*C1, C2)     conv2 weight, BN2 folded in
                      wfc_ref,   # (C2, O)        fc weight, 1/L2 folded in
                      bv_ref,    # (1, C1+C2+O)   packed biases [b1 | b2 | bfc]
                      out_ref):  # (TB, O)
    TB, L, K = xc_ref.shape
    C1 = w1_ref.shape[1]
    C2 = w2_ref.shape[1]
    L2 = L // 2
    pad = K // 2

    bv = bv_ref[...]
    b1 = bv[:, :C1]                       # (1, C1)
    b2 = bv[:, C1:C1 + C2]                # (1, C2)
    bfc = bv[:, C1 + C2:]                 # (1, O)

    # ---- conv1 (+ folded BN1) + ReLU: single MXU matmul over the im2col ----
    xc = xc_ref[...].reshape(TB * L, K)
    h1 = jnp.maximum(
        jnp.dot(xc, w1_ref[...], preferred_element_type=jnp.float32) + b1,
        0.0)                                                   # (TB*L, C1)

    # ---- maxpool1d(kernel=2, stride=2): reshape + max ----
    if L % 2 == 0:
        h1p = jnp.max(h1.reshape(TB, L2, 2, C1), axis=2)       # (TB, L2, C1)
    else:  # PyTorch MaxPool1d floors: drop the trailing element
        h1p = jnp.max(
            h1.reshape(TB, L, C1)[:, :2 * L2, :].reshape(TB, L2, 2, C1), axis=2)
    # dropout1: identity at inference

    # ---- conv2 (+ folded BN2) + ReLU: im2col -> single MXU matmul ----
    if pad > 0:
        zrow = jnp.zeros((TB, pad, C1), jnp.float32)
        hpad = jnp.concatenate([zrow, h1p, zrow], axis=1)      # (TB, L2+2*pad, C1)
    else:
        hpad = h1p
    cols = jnp.concatenate([hpad[:, k:k + L2, :] for k in range(K)],
                           axis=-1)                            # (TB, L2, K*C1)
    h2 = jnp.maximum(
        jnp.dot(cols.reshape(TB * L2, K * C1), w2_ref[...],
                preferred_element_type=jnp.float32) + b2,
        0.0)                                                   # (TB*L2, C2)

    # ---- adaptive avg pool (1/L2 folded into wfc) + fc ----
    g = jnp.sum(h2.reshape(TB, L2, C2), axis=1)                # (TB, C2)
    # dropout2: identity at inference
    out = jnp.dot(g, wfc_ref[...], preferred_element_type=jnp.float32) + bfc
    out_ref[...] = out.astype(out_ref.dtype)


def init_params(key, out_dim=2, channels=(16, 32), kernel_size=3):
    C1, C2 = channels
    K = kernel_size
    ks = jax.random.split(key, 10)
    f32 = jnp.float32
    return {
        'conv1_w': 0.3 * jax.random.normal(ks[0], (C1, 1, K), f32),
        'conv1_b': 0.1 * jax.random.normal(ks[1], (C1,), f32),
        'bn1_g': 1.0 + 0.1 * jax.random.normal(ks[2], (C1,), f32),
        'bn1_b': 0.1 * jax.random.normal(ks[3], (C1,), f32),
        'bn1_rm': jnp.zeros((C1,), f32),
        'bn1_rv': jnp.ones((C1,), f32),
        'conv2_w': 0.2 * jax.random.normal(ks[4], (C2, C1, K), f32),
        'conv2_b': 0.1 * jax.random.normal(ks[5], (C2,), f32),
        'bn2_g': 1.0 + 0.1 * jax.random.normal(ks[6], (C2,), f32),
        'bn2_b': 0.1 * jax.random.normal(ks[7], (C2,), f32),
        'bn2_rm': jnp.zeros((C2,), f32),
        'bn2_rv': jnp.ones((C2,), f32),
        'fc_w': 0.2 * jax.random.normal(ks[8], (out_dim, C2), f32),
        'fc_b': 0.1 * jax.random.normal(ks[9], (out_dim,), f32),
    }


def simple_cnn_forward(x, p):
    B, L = x.shape
    C1, _, K = p['conv1_w'].shape
    C2 = p['conv2_w'].shape[0]
    O = p['fc_w'].shape[0]
    assert K % 2 == 1, "window math assumes odd kernel_size (padding = K//2)"
    pad = K // 2
    L2 = L // 2

    # ---- wrapper-side parameter folding (BatchNorm inference + avg-pool) ----
    s1 = p['bn1_g'] / jnp.sqrt(p['bn1_rv'] + EPS)                        # (C1,)
    w1f = jnp.transpose(p['conv1_w'][:, 0, :]) * s1[None, :]             # (K, C1)
    b1f = p['conv1_b'] * s1 + p['bn1_b'] - p['bn1_rm'] * s1              # (C1,)

    s2 = p['bn2_g'] / jnp.sqrt(p['bn2_rv'] + EPS)                        # (C2,)
    w2f = (jnp.transpose(p['conv2_w'], (2, 1, 0))                        # (K, C1, C2)
           * s2[None, None, :]).reshape(K * C1, C2)
    b2f = p['conv2_b'] * s2 + p['bn2_b'] - p['bn2_rm'] * s2              # (C2,)

    wfc = jnp.transpose(p['fc_w']) / float(L2)                           # (C2, O)
    bvec = jnp.concatenate([b1f, b2f, p['fc_b']]).reshape(1, C1 + C2 + O)

    # ---- conv1 padding + im2col wrapper-side (fuses into producing XLA ops) ----
    xp = jnp.pad(x.astype(jnp.float32), ((0, 0), (pad, pad)))            # (B, L+2*pad)
    x_cols = jnp.stack([xp[:, k:k + L] for k in range(K)], axis=-1)      # (B, L, K)

    # Batch grid: single block at this size; a larger B would pick TB % 8 == 0
    # and shard blocks across TensorCores / pipeline HBM<->VMEM.
    TB = B
    grid = (pl.cdiv(B, TB),)
    return pl.pallas_call(
        simple_cnn_kernel,
        out_shape=jax.ShapeDtypeStruct((B, O), jnp.float32),
        grid=grid,
        in_specs=[
            pl.BlockSpec((TB, L, K), lambda i: (i, 0, 0)),
            pl.BlockSpec((K, C1), lambda i: (0, 0)),
            pl.BlockSpec((K * C1, C2), lambda i: (0, 0)),
            pl.BlockSpec((C2, O), lambda i: (0, 0)),
            pl.BlockSpec((1, C1 + C2 + O), lambda i: (0, 0)),
        ],
        out_specs=pl.BlockSpec((TB, O), lambda i: (i, 0)),
        compiler_params=pltpu.CompilerParams(dimension_semantics=("parallel",)),
    )(x_cols, w1f, w2f, wfc, bvec)


def reference_forward(x, p):
    """Pure-JAX reference of SimpleCNN.forward (inference mode)."""
    dn = ('NCH', 'OIH', 'NCH')

    def bn(h, g, b, rm, rv):
        return ((h - rm[None, :, None]) / jnp.sqrt(rv + EPS)[None, :, None]
                * g[None, :, None] + b[None, :, None])

    h = x[:, None, :]                                                    # (B, 1, L)
    h = jax.lax.conv_general_dilated(h, p['conv1_w'], (1,), [(1, 1)],
                                     dimension_numbers=dn) + p['conv1_b'][None, :, None]
    h = jnp.maximum(bn(h, p['bn1_g'], p['bn1_b'], p['bn1_rm'], p['bn1_rv']), 0.0)
    B, C1, L = h.shape
    h = h.reshape(B, C1, L // 2, 2).max(axis=-1)                         # MaxPool1d(2,2)
    h = jax.lax.conv_general_dilated(h, p['conv2_w'], (1,), [(1, 1)],
                                     dimension_numbers=dn) + p['conv2_b'][None, :, None]
    h = jnp.maximum(bn(h, p['bn2_g'], p['bn2_b'], p['bn2_rm'], p['bn2_rv']), 0.0)
    g = jnp.mean(h, axis=-1)                                             # AdaptiveAvgPool1d(1)
    return g @ p['fc_w'].T + p['fc_b'][None, :]


if __name__ == "__main__":
    B, in_dim = 2, 16
    key = jax.random.PRNGKey(0)
    kx, kp = jax.random.split(key)
    x = jax.random.normal(kx, (B, in_dim), jnp.float32)
    params = init_params(kp, out_dim=2, channels=(16, 32), kernel_size=3)

    out = jax.block_until_ready(simple_cnn_forward(x, params))
    ref = jax.block_until_ready(reference_forward(x, params))

    assert out.shape == (B, 2)
    np.testing.assert_allclose(np.asarray(out), np.asarray(ref), rtol=1e-4, atol=1e-4)
    print("KERNEL_OK")
</pallas_src>

<mosaic_0001>
module attributes {stable_mosaic.version = 11 : i64} {
  func.func @simple_cnn_kernel(%arg0: i32, %arg1: memref<2x16x3xf32, #tpu.memory_space<vmem>>, %arg2: memref<3x16xf32, #tpu.memory_space<vmem>>, %arg3: memref<48x32xf32, #tpu.memory_space<vmem>>, %arg4: memref<32x2xf32, #tpu.memory_space<vmem>>, %arg5: memref<1x50xf32, #tpu.memory_space<vmem>>, %arg6: memref<2x2xf32, #tpu.memory_space<vmem>>) attributes {dimension_semantics = [#tpu.dimension_semantics<parallel>], iteration_bounds = array<i64: 1>, scalar_prefetch = 0 : i64, scratch_operands = 0 : i64, tpu.core_type = #tpu.core_type<tc>, window_params = [{transform_indices = @transform_0, window_bounds = array<i64: 2, 16, 3>}, {pipeline_mode = #tpu.pipeline_mode<synchronous>, transform_indices = @transform_1, window_bounds = array<i64: 3, 16>}, {pipeline_mode = #tpu.pipeline_mode<synchronous>, transform_indices = @transform_2, window_bounds = array<i64: 48, 32>}, {pipeline_mode = #tpu.pipeline_mode<synchronous>, transform_indices = @transform_3, window_bounds = array<i64: 32, 2>}, {pipeline_mode = #tpu.pipeline_mode<synchronous>, transform_indices = @transform_4, window_bounds = array<i64: 1, 50>}, {transform_indices = @transform_5, window_bounds = array<i64: 2, 2>}]} {
    %c0 = arith.constant 0 : index
    %c0_0 = arith.constant 0 : index
    %0 = vector.load %arg5[%c0, %c0_0] : memref<1x50xf32, #tpu.memory_space<vmem>>, vector<1x50xf32>
    %1 = vector.extract_strided_slice %0 {offsets = [0, 0], sizes = [1, 16], strides = [1, 1]} : vector<1x50xf32> to vector<1x16xf32>
    %2 = vector.extract_strided_slice %0 {offsets = [0, 16], sizes = [1, 32], strides = [1, 1]} : vector<1x50xf32> to vector<1x32xf32>
    %3 = vector.extract_strided_slice %0 {offsets = [0, 48], sizes = [1, 2], strides = [1, 1]} : vector<1x50xf32> to vector<1x2xf32>
    %c0_1 = arith.constant 0 : index
    %c0_2 = arith.constant 0 : index
    %c0_3 = arith.constant 0 : index
    %4 = vector.load %arg1[%c0_1, %c0_2, %c0_3] : memref<2x16x3xf32, #tpu.memory_space<vmem>>, vector<2x16x3xf32>
    %5 = vector.shape_cast %4 : vector<2x16x3xf32> to vector<32x3xf32>
    %c0_4 = arith.constant 0 : index
    %c0_5 = arith.constant 0 : index
    %6 = vector.load %arg2[%c0_4, %c0_5] : memref<3x16xf32, #tpu.memory_space<vmem>>, vector<3x16xf32>
    %cst = arith.constant dense<0.000000e+00> : vector<32x16xf32>
    %7 = tpu.matmul %5, %6, %cst {dimension_numbers = #tpu.dot_dimension_numbers<[1], [0], [0], [1], [0, 0, 1, 1], [], []>} : vector<32x3xf32>, vector<3x16xf32>, vector<32x16xf32> -> vector<32x16xf32>
    %8 = vector.broadcast %1 : vector<1x16xf32> to vector<32x16xf32>
    %9 = arith.addf %7, %8 : vector<32x16xf32>
    %cst_6 = arith.constant 0.000000e+00 : f32
    %10 = vector.broadcast %cst_6 : f32 to vector<32x16xf32>
    %11 = arith.maximumf %9, %10 : vector<32x16xf32>
    %12 = vector.shape_cast %11 : vector<32x16xf32> to vector<2x8x2x16xf32>
    %cst_7 = arith.constant dense<0xFF800000> : vector<2x8x16xf32>
    %13 = vector.multi_reduction <maximumf>, %12, %cst_7 [2] : vector<2x8x2x16xf32> to vector<2x8x16xf32>
    %cst_8 = arith.constant 0.000000e+00 : f32
    %14 = vector.broadcast %cst_8 : f32 to vector<2x1x16xf32>
    %15 = tpu.concatenate %14, %13, %14 in 1 : vector<2x1x16xf32>, vector<2x8x16xf32>, vector<2x1x16xf32> -> vector<2x10x16xf32>
    %16 = vector.extract_strided_slice %15 {offsets = [0, 0, 0], sizes = [2, 8, 16], strides = [1, 1, 1]} : vector<2x10x16xf32> to vector<2x8x16xf32>
    %17 = vector.extract_strided_slice %15 {offsets = [0, 1, 0], sizes = [2, 8, 16], strides = [1, 1, 1]} : vector<2x10x16xf32> to vector<2x8x16xf32>
    %18 = vector.extract_strided_slice %15 {offsets = [0, 2, 0], sizes = [2, 8, 16], strides = [1, 1, 1]} : vector<2x10x16xf32> to vector<2x8x16xf32>
    %19 = tpu.concatenate %16, %17, %18 in 2 : vector<2x8x16xf32>, vector<2x8x16xf32>, vector<2x8x16xf32> -> vector<2x8x48xf32>
    %20 = vector.shape_cast %19 : vector<2x8x48xf32> to vector<16x48xf32>
    %c0_9 = arith.constant 0 : index
    %c0_10 = arith.constant 0 : index
    %21 = vector.load %arg3[%c0_9, %c0_10] : memref<48x32xf32, #tpu.memory_space<vmem>>, vector<48x32xf32>
    %cst_11 = arith.constant dense<0.000000e+00> : vector<16x32xf32>
    %22 = tpu.matmul %20, %21, %cst_11 {dimension_numbers = #tpu.dot_dimension_numbers<[1], [0], [0], [1], [0, 0, 1, 1], [], []>} : vector<16x48xf32>, vector<48x32xf32>, vector<16x32xf32> -> vector<16x32xf32>
    %23 = vector.broadcast %2 : vector<1x32xf32> to vector<16x32xf32>
    %24 = arith.addf %22, %23 : vector<16x32xf32>
    %cst_12 = arith.constant 0.000000e+00 : f32
    %25 = vector.broadcast %cst_12 : f32 to vector<16x32xf32>
    %26 = arith.maximumf %24, %25 : vector<16x32xf32>
    %27 = vector.shape_cast %26 : vector<16x32xf32> to vector<2x8x32xf32>
    %cst_13 = arith.constant dense<0.000000e+00> : vector<2x32xf32>
    %28 = vector.multi_reduction <add>, %27, %cst_13 [1] : vector<2x8x32xf32> to vector<2x32xf32>
    %c0_14 = arith.constant 0 : index
    %c0_15 = arith.constant 0 : index
    %29 = vector.load %arg4[%c0_14, %c0_15] : memref<32x2xf32, #tpu.memory_space<vmem>>, vector<32x2xf32>
    %cst_16 = arith.constant dense<0.000000e+00> : vector<2x2xf32>
    %30 = tpu.matmul %28, %29, %cst_16 {dimension_numbers = #tpu.dot_dimension_numbers<[1], [0], [0], [1], [0, 0, 1, 1], [], []>} : vector<2x32xf32>, vector<32x2xf32>, vector<2x2xf32> -> vector<2x2xf32>
    %31 = vector.broadcast %3 : vector<1x2xf32> to vector<2x2xf32>
    %32 = arith.addf %30, %31 : vector<2x2xf32>
    %c0_17 = arith.constant 0 : index
    %c0_18 = arith.constant 0 : index
    %33 = vector.load %arg6[%c0_17, %c0_18] : memref<2x2xf32, #tpu.memory_space<vmem>>, vector<2x2xf32>
    tpu.vector_store %arg6[%c0_17, %c0_18], %32 {strides = array<i32>} : memref<2x2xf32, #tpu.memory_space<vmem>>, vector<2x2xf32>,
    return
  }
  func.func @transform_0(%arg0: i32) -> (i32, i32, i32) {
    %c0_i32 = arith.constant 0 : i32
    %c0_i32_0 = arith.constant 0 : i32
    %c0_i32_1 = arith.constant 0 : i32
    return %arg0, %c0_i32, %c0_i32_0 : i32, i32, i32
  }
  func.func @transform_1(%arg0: i32) -> (i32, i32) {
    %c0_i32 = arith.constant 0 : i32
    %c0_i32_0 = arith.constant 0 : i32
    %c0_i32_1 = arith.constant 0 : i32
    return %c0_i32, %c0_i32_0 : i32, i32
  }
  func.func @transform_2(%arg0: i32) -> (i32, i32) {
    %c0_i32 = arith.constant 0 : i32
    %c0_i32_0 = arith.constant 0 : i32
    %c0_i32_1 = arith.constant 0 : i32
    return %c0_i32, %c0_i32_0 : i32, i32
  }
  func.func @transform_3(%arg0: i32) -> (i32, i32) {
    %c0_i32 = arith.constant 0 : i32
    %c0_i32_0 = arith.constant 0 : i32
    %c0_i32_1 = arith.constant 0 : i32
    return %c0_i32, %c0_i32_0 : i32, i32
  }
  func.func @transform_4(%arg0: i32) -> (i32, i32) {
    %c0_i32 = arith.constant 0 : i32
    %c0_i32_0 = arith.constant 0 : i32
    %c0_i32_1 = arith.constant 0 : i32
    return %c0_i32, %c0_i32_0 : i32, i32
  }
  func.func @transform_5(%arg0: i32) -> (i32, i32) {
    %c0_i32 = arith.constant 0 : i32
    %c0_i32_0 = arith.constant 0 : i32
    return %arg0, %c0_i32 : i32, i32
  }
}

</mosaic_0001>

<llo_original>
// kernel: tpu_custom_call.1
$region0: #{tpu_custom_call.1}
  #allocation0 [shape = 'u32[]', space=smem, size = 0x4, offset = 0x4, fixed_abs, tag = 'smem constant byte address 0x4 - core index']
  #allocation1 [shape = 'u32[144,128]{1,0:T(1,128)}', space=vmem, size = 0x12000, scoped, tag = 'internal scratch']
  %s0 = inlined_call_operand.vmem [shape: f32[2,16,3], index: 0, kind: input, shape index: {}]
  %s1 = inlined_call_operand.vmem [shape: f32[3,16], index: 1, kind: input, shape index: {}]
  %s2 = inlined_call_operand.vmem [shape: f32[48,32], index: 2, kind: input, shape index: {}]
  %s3 = inlined_call_operand.vmem [shape: f32[32,2], index: 3, kind: input, shape index: {}]
  %s4 = inlined_call_operand.vmem [shape: f32[1,50], index: 4, kind: input, shape index: {}]
  %s5 = inlined_call_operand.hbm [shape: f32[2,2], index: 5, kind: output, shape index: {}]
  %s6 = sld [smem:[#allocation0]]
  $region30: #{tpu_custom_call.1} parent=0
    _
  %s8 = ssub.s32 1, %s6
  %s9 = scalar_select 0, %s8, %s6
  $region1: #{tpu_custom_call.1} parent=0
    #allocation2 [shape = 'u8[1024]{0}', space=vmem, size = 0x400, scoped, tag = 'output window, operand 0, single buffered']
    #allocation3 [shape = 's32[1]{0}', space=sflag, size = 0x4, scoped, tag = 'scoped memory for tpu_custom_call.1']
    %10 = vsyncpa [#allocation3], 0
    // Predicated region
    $region2: #{tpu_custom_call.1} parent=1 // pred_check
      _
    $region3: #{tpu_custom_call.1} parent=1 // pred_check_branch
      %12 = sbr.rel (0) target = $region5
    $region4: #{tpu_custom_call.1} parent=1 // pred_region
      _
    $region5: #{tpu_custom_call.1} parent=1 // pred_fallthru
      _
    // Predicated region
    $region6: #{tpu_custom_call.1} parent=1 // pred_check
      _
    $region7: #{tpu_custom_call.1} parent=1 // pred_check_branch
      %14 = sbr.rel (0) target = $region9
    $region8: #{tpu_custom_call.1} parent=1 // pred_region
      _
    $region9: #{tpu_custom_call.1} parent=1 // pred_fallthru
      _
    // Predicated region
    $region10: #{tpu_custom_call.1} parent=1 // pred_check
      _
    $region11: #{tpu_custom_call.1} parent=1 // pred_check_branch
      %16 = sbr.rel (0) target = $region13
    $region12: #{tpu_custom_call.1} parent=1 // pred_region
      _
    $region13: #{tpu_custom_call.1} parent=1 // pred_fallthru
      _
    // Predicated region
    $region14: #{tpu_custom_call.1} parent=1 // pred_check
      _
    $region15: #{tpu_custom_call.1} parent=1 // pred_check_branch
      %18 = sbr.rel (0) target = $region17
    $region16: #{tpu_custom_call.1} parent=1 // pred_region
      _
    $region17: #{tpu_custom_call.1} parent=1 // pred_fallthru
      _
    // Predicated region
    $region18: #{tpu_custom_call.1} parent=1 // pred_check
      _
    $region19: #{tpu_custom_call.1} parent=1 // pred_check_branch
      %20 = sbr.rel (0) target = $region21
    $region20: #{tpu_custom_call.1} parent=1 // pred_region
      _
    $region21: #{tpu_custom_call.1} parent=1 // pred_fallthru
      _
    %v21 = vld [vmem:[%s4] sm:$0x1]
    %v22 = vld [vmem:[%s0] sm:$0xff]
    %v23 = vld [vmem:[%s0 + $0x8] sm:$0xff]
    %v24 = vld [vmem:[%s0 + $0x10] sm:$0xff]
    %v25 = vld [vmem:[%s0 + $0x18] sm:$0xff]
    %v26 = vld [vmem:[%s1] sm:$0x7]
    %v28 = vlaneseq
    %v29 = vshrl.u32 %v28, 7
    %v30 = vsub.s32 0, %v29
    %v31 = vrot.slane %v21, %v30
    %vm33 = vcmask 23552
    %v35 = vsel %vm33, %v22, 0
    %v38 = vsel %vm33, %v23, 0
    %v41 = vsel %vm33, %v24, 0
    %v44 = vsel %vm33, %v25, 0
    %vm46 = vcmask 1042432
    %v48 = vsel %vm46, %v26, 0
    %50 = vmatprep.subr.mxu0 0.0
    %51 = vmatpush1.msra.mxu0 %v48
    %52 = vmatprep.subr.mxu0 0.0
    %53 = vmatpush1.msra.mxu0 0.0
    %54 = vmatprep.subr.mxu0 0.0
    %55 = vmatpush1.msra.mxu0 0.0
    %56 = vmatprep.subr.mxu0 0.0
    %57 = vmatpush1.msra.mxu0 0.0
    %58 = vmatprep.subr.mxu0 0.0
    %59 = vmatpush1.msra.mxu0 0.0
    %60 = vmatprep.subr.mxu0 0.0
    %61 = vmatpush1.msra.mxu0 0.0
    %62 = vmatprep.subr.mxu0 0.0
    %63 = vmatpush1.msra.mxu0 0.0
    %64 = vmatprep.subr.mxu0 0.0
    %65 = vmatpush1.msra.mxu0 0.0
    %66 = vmatprep.subr.mxu0 0.0
    %67 = vmatpush1.msra.mxu0 0.0
    %68 = vmatprep.subr.mxu0 0.0
    %69 = vmatpush1.msra.mxu0 0.0
    %70 = vmatprep.subr.mxu0 0.0
    %71 = vmatpush1.msra.mxu0 0.0
    %72 = vmatprep.subr.mxu0 0.0
    %73 = vmatpush1.msra.mxu0 0.0
    %74 = vmatprep.subr.mxu0 0.0
    %75 = vmatpush1.msra.mxu0 0.0
    %76 = vmatprep.subr.mxu0 0.0
    %77 = vmatpush1.msra.mxu0 0.0
    %78 = vmatprep.subr.mxu0 0.0
    %79 = vmatpush1.msra.mxu0 0.0
    %80 = vmatprep.subr.mxu0 0.0
    %81 = vmatpush1.msra.mxu0 0.0
    %82 = vmatprep.subr.mxu0 0.0
    %83 = vmatpush1.msra.mxu0 0.0
    %84 = vmatprep.subr.mxu0 0.0
    %85 = vmatpush1.msra.mxu0 0.0
    %86 = vmatprep.subr.mxu0 0.0
    %87 = vmatpush1.msra.mxu0 0.0
    %88 = vmatprep.subr.mxu0 0.0
    %89 = vmatpush1.msra.mxu0 0.0
    %90 = vmatprep.subr.mxu0 0.0
    %91 = vmatpush1.msra.mxu0 0.0
    %92 = vmatprep.subr.mxu0 0.0
    %93 = vmatpush1.msra.mxu0 0.0
    %94 = vmatprep.subr.mxu0 0.0
    %95 = vmatpush1.msra.mxu0 0.0
    %96 = vmatprep.subr.mxu0 0.0
    %97 = vmatpush1.msra.mxu0 0.0
    %98 = vmatprep.subr.mxu0 0.0
    %99 = vmatpush1.msra.mxu0 0.0
    %100 = vmatprep.subr.mxu0 0.0
    %101 = vmatpush1.msra.mxu0 0.0
    %102 = vmatprep.subr.mxu0 0.0
    %103 = vmatpush1.msra.mxu0 0.0
    %104 = vmatprep.subr.mxu0 0.0
    %105 = vmatpush1.msra.mxu0 0.0
    %106 = vmatprep.subr.mxu0 0.0
    %107 = vmatpush1.msra.mxu0 0.0
    %108 = vmatprep.subr.mxu0 0.0
    %109 = vmatpush1.msra.mxu0 0.0
    %110 = vmatprep.subr.mxu0 0.0
    %111 = vmatpush1.msra.mxu0 0.0
    %112 = vmatprep.subr.mxu0 0.0
    %113 = vmatpush1.msra.mxu0 0.0
    %114 = vmatprep.mubr.f32.mxu0 0.0
    %115 = vmatmul.mubr.f32.gmra.mrb[0].mxu0 %v35
    %v116 = vpop.f32.mrb[0].mxu0
    %v117 = vadd.f32 %v31, %v116
    %v118 = vpop.f32.mrb[0].mxu0
    %119 = vmatprep.mubr.f32.mxu0 0.0
    %120 = vmatmul.mubr.f32.gmra.mrb[0].mxu0 %v38
    %v121 = vpop.f32.mrb[0].mxu0
    %v122 = vadd.f32 %v31, %v121
    %v123 = vpop.f32.mrb[0].mxu0
    %124 = vmatprep.mubr.f32.mxu0 0.0
    %125 = vmatmul.mubr.f32.gmra.mrb[0].mxu0 %v41
    %v126 = vpop.f32.mrb[0].mxu0
    %v127 = vadd.f32 %v31, %v126
    %v128 = vpop.f32.mrb[0].mxu0
    %129 = vmatprep.mubr.f32.mxu0 0.0
    %130 = vmatmul.mubr.f32.gmra.mrb[0].mxu0 %v44
    %v131 = vpop.f32.mrb[0].mxu0
    %v132 = vadd.f32 %v31, %v131
    %v133 = vpop.f32.mrb[0].mxu0
    %134 = vdwg.mxu0
    %v135 = vmax.f32 %v117, 0.0
    %v136 = vmax.f32 %v122, 0.0
    %v137 = vmax.f32 %v127, 0.0
    %v138 = vmax.f32 %v132, 0.0
    %v143 = vcombine.high %v135, %v135
    %v145 = vunpack.c.l.s4 1983009808
    %v146 = vunpack.c.0.s8 %v145
    %v147 = vlaneseq
    %v148 = vshrl.u32 %v147, 7
    %v149 = vsub.s32 %v146, %v148
    %v150 = vrot.slane %v135, %v149
    %v152 = vunpack.c.l.s4 1983009808
    %v153 = vunpack.c.0.s8 %v152
    %v154 = vlaneseq
    %v155 = vshrl.u32 %v154, 7
    %v156 = vsub.s32 %v153, %v155
    %v157 = vrot.slane %v143, %v156
    %v158 = vcombine.high %v150, %v150
    %v159 = vcombine.high %v157, %v157
    %v160 = vcombine.high %v136, %v136
    %v162 = vunpack.c.l.s4 1983009808
    %v163 = vunpack.c.0.s8 %v162
    %v164 = vlaneseq
    %v165 = vshrl.u32 %v164, 7
    %v166 = vsub.s32 %v163, %v165
    %v167 = vrot.slane %v136, %v166
    %v169 = vunpack.c.l.s4 1983009808
    %v170 = vunpack.c.0.s8 %v169
    %v171 = vlaneseq
    %v172 = vshrl.u32 %v171, 7
    %v173 = vsub.s32 %v170, %v172
    %v174 = vrot.slane %v160, %v173
    %v175 = vcombine.high %v167, %v167
    %v176 = vcombine.high %v174, %v174
    %v177 = vcombine.high %v137, %v137
    %v179 = vunpack.c.l.s4 1983009808
    %v180 = vunpack.c.0.s8 %v179
    %v181 = vlaneseq
    %v182 = vshrl.u32 %v181, 7
    %v183 = vsub.s32 %v180, %v182
    %v184 = vrot.slane %v137, %v183
    %v186 = vunpack.c.l.s4 1983009808
    %v187 = vunpack.c.0.s8 %v186
    %v188 = vlaneseq
    %v189 = vshrl.u32 %v188, 7
    %v190 = vsub.s32 %v187, %v189
    %v191 = vrot.slane %v177, %v190
    %v192 = vcombine.high %v184, %v184
    %v193 = vcombine.high %v191, %v191
    %v194 = vcombine.high %v138, %v138
    %v196 = vunpack.c.l.s4 1983009808
    %v197 = vunpack.c.0.s8 %v196
    %v198 = vlaneseq
    %v199 = vshrl.u32 %v198, 7
    %v200 = vsub.s32 %v197, %v199
    %v201 = vrot.slane %v138, %v200
    %v203 = vunpack.c.l.s4 1983009808
    %v204 = vunpack.c.0.s8 %v203
    %v205 = vlaneseq
    %v206 = vshrl.u32 %v205, 7
    %v207 = vsub.s32 %v204, %v206
    %v208 = vrot.slane %v194, %v207
    %v209 = vcombine.high %v201, %v201
    %v210 = vcombine.high %v208, %v208
    %vm227 = vcmask 123904
    %v228 = vsel %vm227, %v150, -inf
    %v229 = vrot.slane %v228, 4
    %v230 = vmax.f32 %v228, %v229
    %v231 = vrot.slane %v230, 2
    %v232 = vmax.f32 %v230, %v231
    %v233 = vrot.slane %v232, 1
    %v234 = vmax.f32 %v232, %v233
    %v235 = vsel %vm227, %v158, -inf
    %v236 = vrot.slane %v235, 4
    %v237 = vmax.f32 %v235, %v236
    %v238 = vrot.slane %v237, 2
    %v239 = vmax.f32 %v237, %v238
    %v240 = vrot.slane %v239, 1
    %v241 = vmax.f32 %v239, %v240
    %v242 = vsel %vm227, %v157, -inf
    %v243 = vrot.slane %v242, 4
    %v244 = vmax.f32 %v242, %v243
    %v245 = vrot.slane %v244, 2
    %v246 = vmax.f32 %v244, %v245
    %v247 = vrot.slane %v246, 1
    %v248 = vmax.f32 %v246, %v247
    %v249 = vsel %vm227, %v159, -inf
    %v250 = vrot.slane %v249, 4
    %v251 = vmax.f32 %v249, %v250
    %v252 = vrot.slane %v251, 2
    %v253 = vmax.f32 %v251, %v252
    %v254 = vrot.slane %v253, 1
    %v255 = vmax.f32 %v253, %v254
    %v256 = vsel %vm227, %v167, -inf
    %v257 = vrot.slane %v256, 4
    %v258 = vmax.f32 %v256, %v257
    %v259 = vrot.slane %v258, 2
    %v260 = vmax.f32 %v258, %v259
    %v261 = vrot.slane %v260, 1
    %v262 = vmax.f32 %v260, %v261
    %v263 = vsel %vm227, %v175, -inf
    %v264 = vrot.slane %v263, 4
    %v265 = vmax.f32 %v263, %v264
    %v266 = vrot.slane %v265, 2
    %v267 = vmax.f32 %v265, %v266
    %v268 = vrot.slane %v267, 1
    %v269 = vmax.f32 %v267, %v268
    %v270 = vsel %vm227, %v174, -inf
    %v271 = vrot.slane %v270, 4
    %v272 = vmax.f32 %v270, %v271
    %v273 = vrot.slane %v272, 2
    %v274 = vmax.f32 %v272, %v273
    %v275 = vrot.slane %v274, 1
    %v276 = vmax.f32 %v274, %v275
    %v277 = vsel %vm227, %v176, -inf
    %v278 = vrot.slane %v277, 4
    %v279 = vmax.f32 %v277, %v278
    %v280 = vrot.slane %v279, 2
    %v281 = vmax.f32 %v279, %v280
    %v282 = vrot.slane %v281, 1
    %v283 = vmax.f32 %v281, %v282
    %v284 = vsel %vm227, %v184, -inf
    %v285 = vrot.slane %v284, 4
    %v286 = vmax.f32 %v284, %v285
    %v287 = vrot.slane %v286, 2
    %v288 = vmax.f32 %v286, %v287
    %v289 = vrot.slane %v288, 1
    %v290 = vmax.f32 %v288, %v289
    %v291 = vsel %vm227, %v192, -inf
    %v292 = vrot.slane %v291, 4
    %v293 = vmax.f32 %v291, %v292
    %v294 = vrot.slane %v293, 2
    %v295 = vmax.f32 %v293, %v294
    %v296 = vrot.slane %v295, 1
    %v297 = vmax.f32 %v295, %v296
    %v298 = vsel %vm227, %v191, -inf
    %v299 = vrot.slane %v298, 4
    %v300 = vmax.f32 %v298, %v299
    %v301 = vrot.slane %v300, 2
    %v302 = vmax.f32 %v300, %v301
    %v303 = vrot.slane %v302, 1
    %v304 = vmax.f32 %v302, %v303
    %v305 = vsel %vm227, %v193, -inf
    %v306 = vrot.slane %v305, 4
    %v307 = vmax.f32 %v305, %v306
    %v308 = vrot.slane %v307, 2
    %v309 = vmax.f32 %v307, %v308
    %v310 = vrot.slane %v309, 1
    %v311 = vmax.f32 %v309, %v310
    %v312 = vsel %vm227, %v201, -inf
    %v313 = vrot.slane %v312, 4
    %v314 = vmax.f32 %v312, %v313
    %v315 = vrot.slane %v314, 2
    %v316 = vmax.f32 %v314, %v315
    %v317 = vrot.slane %v316, 1
    %v318 = vmax.f32 %v316, %v317
    %v319 = vsel %vm227, %v209, -inf
    %v320 = vrot.slane %v319, 4
    %v321 = vmax.f32 %v319, %v320
    %v322 = vrot.slane %v321, 2
    %v323 = vmax.f32 %v321, %v322
    %v324 = vrot.slane %v323, 1
    %v325 = vmax.f32 %v323, %v324
    %v326 = vsel %vm227, %v208, -inf
    %v327 = vrot.slane %v326, 4
    %v328 = vmax.f32 %v326, %v327
    %v329 = vrot.slane %v328, 2
    %v330 = vmax.f32 %v328, %v329
    %v331 = vrot.slane %v330, 1
    %v332 = vmax.f32 %v330, %v331
    %v333 = vsel %vm227, %v210, -inf
    %v334 = vrot.slane %v333, 4
    %v335 = vmax.f32 %v333, %v334
    %v336 = vrot.slane %v335, 2
    %v337 = vmax.f32 %v335, %v336
    %v338 = vrot.slane %v337, 1
    %v339 = vmax.f32 %v337, %v338
    %vm356 = vcmask 1042434
    %v357 = vsel %vm356, %v241, %v234
    %vm358 = vcmask 1043459
    %v359 = vsel %vm358, %v248, %v357
    %vm360 = vcmask 1044484
    %v361 = vsel %vm360, %v255, %v359
    %vm362 = vcmask 1045509
    %v363 = vsel %vm362, %v262, %v361
    %vm364 = vcmask 1046534
    %v365 = vsel %vm364, %v269, %v363
    %vm366 = vcmask 1047559
    %v367 = vsel %vm366, %v276, %v365
    %v368 = vsel %vm356, %v297, %v290
    %v369 = vsel %vm358, %v304, %v368
    %v370 = vsel %vm360, %v311, %v369
    %v371 = vsel %vm362, %v318, %v370
    %v372 = vsel %vm364, %v325, %v371
    %v373 = vsel %vm366, %v332, %v372
    %vm378 = vcmask 1040384
    %v379 = vsel %vm378, 0.0, %v367
    %v380 = vsel %vm378, 0.0, %v373
    %v381 = vsel %vm378, %v283, 0.0
    %v382 = vsel %vm378, %v339, 0.0
    %vm387 = vcmask 1046528
    %v388 = vrot.slane %v379, 1
    %v389 = vrot.slane %v381, 1
    %v390 = vsel %vm387, %v388, %v389
    %v391 = vrot.slane %v380, 1
    %v392 = vrot.slane %v382, 1
    %v393 = vsel %vm387, %v391, %v392
    %394 = vrot.lane.b32.xlu0 %v390, 16
    %v395 = vpop.permute.xlu0 %394
    %396 = vrot.lane.b32.xlu0 %v393, 16
    %v397 = vpop.permute.xlu0 %396
    %vm400 = vcmask 1045504
    %v401 = vrot.slane %v379, 2
    %v402 = vrot.slane %v381, 2
    %v403 = vsel %vm400, %v401, %v402
    %v404 = vrot.slane %v380, 2
    %v405 = vrot.slane %v382, 2
    %v406 = vsel %vm400, %v404, %v405
    %407 = vrot.lane.b32.xlu0 %v403, 32
    %v408 = vpop.permute.xlu0 %407
    %409 = vrot.lane.b32.xlu0 %v406, 32
    %v410 = vpop.permute.xlu0 %409
    %vm413 = vcmask 130048
    %v414 = vsel %vm413, %v379, %v395
    %v415 = vsel %vm413, %v380, %v397
    %vm416 = vcmask 261120
    %v417 = vsel %vm416, %v414, %v408
    %v418 = vsel %vm416, %v415, %v410
    %v419 = vld [vmem:[%s2] sm:$0xff]
    %v420 = vld [vmem:[%s2 + $0x8] sm:$0xff]
    %v421 = vld [vmem:[%s2 + $0x10] sm:$0xff]
    %v422 = vld [vmem:[%s2 + $0x18] sm:$0xff]
    %v423 = vld [vmem:[%s2 + $0x20] sm:$0xff]
    %v424 = vld [vmem:[%s2 + $0x28] sm:$0xff]
    %425 = vrot.lane.b32.xlu0 %v31, 112
    %v426 = vpop.permute.xlu0 %425
    %vm428 = vcmask 392192
    %v430 = vsel %vm428, %v417, 0
    %v433 = vsel %vm428, %v418, 0
    %435 = vmatprep.subr.mxu0 0.0
    %436 = vmatpush1.msra.mxu0 %v419
    %437 = vmatprep.subr.mxu0 0.0
    %438 = vmatpush1.msra.mxu0 %v420
    %439 = vmatprep.subr.mxu0 0.0
    %440 = vmatpush1.msra.mxu0 %v421
    %441 = vmatprep.subr.mxu0 0.0
    %442 = vmatpush1.msra.mxu0 %v422
    %443 = vmatprep.subr.mxu0 0.0
    %444 = vmatpush1.msra.mxu0 %v423
    %445 = vmatprep.subr.mxu0 0.0
    %446 = vmatpush1.msra.mxu0 %v424
    %447 = vmatprep.subr.mxu0 0.0
    %448 = vmatpush1.msra.mxu0 0.0
    %449 = vmatprep.subr.mxu0 0.0
    %450 = vmatpush1.msra.mxu0 0.0
    %451 = vmatprep.subr.mxu0 0.0
    %452 = vmatpush1.msra.mxu0 0.0
    %453 = vmatprep.subr.mxu0 0.0
    %454 = vmatpush1.msra.mxu0 0.0
    %455 = vmatprep.subr.mxu0 0.0
    %456 = vmatpush1.msra.mxu0 0.0
    %457 = vmatprep.subr.mxu0 0.0
    %458 = vmatpush1.msra.mxu0 0.0
    %459 = vmatprep.subr.mxu0 0.0
    %460 = vmatpush1.msra.mxu0 0.0
    %461 = vmatprep.subr.mxu0 0.0
    %462 = vmatpush1.msra.mxu0 0.0
    %463 = vmatprep.subr.mxu0 0.0
    %464 = vmatpush1.msra.mxu0 0.0
    %465 = vmatprep.subr.mxu0 0.0
    %466 = vmatpush1.msra.mxu0 0.0
    %467 = vmatprep.subr.mxu0 0.0
    %468 = vmatpush1.msra.mxu0 0.0
    %469 = vmatprep.subr.mxu0 0.0
    %470 = vmatpush1.msra.mxu0 0.0
    %471 = vmatprep.subr.mxu0 0.0
    %472 = vmatpush1.msra.mxu0 0.0
    %473 = vmatprep.subr.mxu0 0.0
    %474 = vmatpush1.msra.mxu0 0.0
    %475 = vmatprep.subr.mxu0 0.0
    %476 = vmatpush1.msra.mxu0 0.0
    %477 = vmatprep.subr.mxu0 0.0
    %478 = vmatpush1.msra.mxu0 0.0
    %479 = vmatprep.subr.mxu0 0.0
    %480 = vmatpush1.msra.mxu0 0.0
    %481 = vmatprep.subr.mxu0 0.0
    %482 = vmatpush1.msra.mxu0 0.0
    %483 = vmatprep.subr.mxu0 0.0
    %484 = vmatpush1.msra.mxu0 0.0
    %485 = vmatprep.subr.mxu0 0.0
    %486 = vmatpush1.msra.mxu0 0.0
    %487 = vmatprep.subr.mxu0 0.0
    %488 = vmatpush1.msra.mxu0 0.0
    %489 = vmatprep.subr.mxu0 0.0
    %490 = vmatpush1.msra.mxu0 0.0
    %491 = vmatprep.subr.mxu0 0.0
    %492 = vmatpush1.msra.mxu0 0.0
    %493 = vmatprep.subr.mxu0 0.0
    %494 = vmatpush1.msra.mxu0 0.0
    %495 = vmatprep.subr.mxu0 0.0
    %496 = vmatpush1.msra.mxu0 0.0
    %497 = vmatprep.subr.mxu0 0.0
    %498 = vmatpush1.msra.mxu0 0.0
    %499 = vmatprep.mubr.f32.mxu0 0.0
    %500 = vmatmul.mubr.f32.gmra.mrb[0].mxu0 %v430
    %v501 = vpop.f32.mrb[0].mxu0
    %v502 = vadd.f32 %v426, %v501
    %v503 = vpop.f32.mrb[0].mxu0
    %504 = vmatprep.mubr.f32.mxu0 0.0
    %505 = vmatmul.mubr.f32.gmra.mrb[0].mxu0 %v433
    %v506 = vpop.f32.mrb[0].mxu0
    %v507 = vadd.f32 %v426, %v506
    %v508 = vpop.f32.mrb[0].mxu0
    %509 = vdwg.mxu0
    %v510 = vmax.f32 %v502, 0.0
    %v511 = vmax.f32 %v507, 0.0
    %v512 = vsel %vm416, %v510, 0.0
    %v513 = vrot.slane %v512, 4
    %v514 = vadd.f32 %v512, %v513
    %v515 = vrot.slane %v514, 2
    %v516 = vadd.f32 %v514, %v515
    %v517 = vrot.slane %v516, 1
    %v518 = vadd.f32 %v516, %v517
    %v519 = vsel %vm416, %v511, 0.0
    %v520 = vrot.slane %v519, 4
    %v521 = vadd.f32 %v519, %v520
    %v522 = vrot.slane %v521, 2
    %v523 = vadd.f32 %v521, %v522
    %v524 = vrot.slane %v523, 1
    %v525 = vadd.f32 %v523, %v524
    %v526 = vld [vmem:[%s3] sm:$0xff]
    %v527 = vld [vmem:[%s3 + $0x8] sm:$0xff]
    %v528 = vld [vmem:[%s3 + $0x10] sm:$0xff]
    %v529 = vld [vmem:[%s3 + $0x18] sm:$0xff]
    %vm532 = vcmask 1041409
    %v533 = vsel %vm532, %v525, %v518
    %534 = vrot.lane.b32.xlu0 %v31, 80
    %v535 = vpop.permute.xlu0 %534
    %v537 = vsel %vm416, %v533, 0
    %539 = vmatprep.subr.mxu0 0.0
    %540 = vmatpush1.msra.mxu0 %v526
    %541 = vmatprep.subr.mxu0 0.0
    %542 = vmatpush1.msra.mxu0 %v527
    %543 = vmatprep.subr.mxu0 0.0
    %544 = vmatpush1.msra.mxu0 %v528
    %545 = vmatprep.subr.mxu0 0.0
    %546 = vmatpush1.msra.mxu0 %v529
    %547 = vmatprep.subr.mxu0 0.0
    %548 = vmatpush1.msra.mxu0 0.0
    %549 = vmatprep.subr.mxu0 0.0
    %550 = vmatpush1.msra.mxu0 0.0
    %551 = vmatprep.subr.mxu0 0.0
    %552 = vmatpush1.msra.mxu0 0.0
    %553 = vmatprep.subr.mxu0 0.0
    %554 = vmatpush1.msra.mxu0 0.0
    %555 = vmatprep.subr.mxu0 0.0
    %556 = vmatpush1.msra.mxu0 0.0
    %557 = vmatprep.subr.mxu0 0.0
    %558 = vmatpush1.msra.mxu0 0.0
    %559 = vmatprep.subr.mxu0 0.0
    %560 = vmatpush1.msra.mxu0 0.0
    %561 = vmatprep.subr.mxu0 0.0
    %562 = vmatpush1.msra.mxu0 0.0
    %563 = vmatprep.subr.mxu0 0.0
    %564 = vmatpush1.msra.mxu0 0.0
    %565 = vmatprep.subr.mxu0 0.0
    %566 = vmatpush1.msra.mxu0 0.0
    %567 = vmatprep.subr.mxu0 0.0
    %568 = vmatpush1.msra.mxu0 0.0
    %569 = vmatprep.subr.mxu0 0.0
    %570 = vmatpush1.msra.mxu0 0.0
    %571 = vmatprep.subr.mxu0 0.0
    %572 = vmatpush1.msra.mxu0 0.0
    %573 = vmatprep.subr.mxu0 0.0
    %574 = vmatpush1.msra.mxu0 0.0
    %575 = vmatprep.subr.mxu0 0.0
    %576 = vmatpush1.msra.mxu0 0.0
    %577 = vmatprep.subr.mxu0 0.0
    %578 = vmatpush1.msra.mxu0 0.0
    %579 = vmatprep.subr.mxu0 0.0
    %580 = vmatpush1.msra.mxu0 0.0
    %581 = vmatprep.subr.mxu0 0.0
    %582 = vmatpush1.msra.mxu0 0.0
    %583 = vmatprep.subr.mxu0 0.0
    %584 = vmatpush1.msra.mxu0 0.0
    %585 = vmatprep.subr.mxu0 0.0
    %586 = vmatpush1.msra.mxu0 0.0
    %587 = vmatprep.subr.mxu0 0.0
    %588 = vmatpush1.msra.mxu0 0.0
    %589 = vmatprep.subr.mxu0 0.0
    %590 = vmatpush1.msra.mxu0 0.0
    %591 = vmatprep.subr.mxu0 0.0
    %592 = vmatpush1.msra.mxu0 0.0
    %593 = vmatprep.subr.mxu0 0.0
    %594 = vmatpush1.msra.mxu0 0.0
    %595 = vmatprep.subr.mxu0 0.0
    %596 = vmatpush1.msra.mxu0 0.0
    %597 = vmatprep.subr.mxu0 0.0
    %598 = vmatpush1.msra.mxu0 0.0
    %599 = vmatprep.subr.mxu0 0.0
    %600 = vmatpush1.msra.mxu0 0.0
    %601 = vmatprep.subr.mxu0 0.0
    %602 = vmatpush1.msra.mxu0 0.0
    %603 = vmatprep.mubr.f32.mxu0 0.0
    %604 = vmatmul.mubr.f32.gmra.mrb[0].mxu0 %v537
    %v605 = vpop.f32.mrb[0].mxu0
    %v606 = vadd.f32 %v535, %v605
    %v607 = vpop.f32.mrb[0].mxu0
    %608 = vdwg.mxu0
    %vm609 = vcmask 9216
    %610 = vst.msk [vmem:[#allocation2] sm:$0x3] %vm609, %v606
    // Predicated region
    $region22: #{tpu_custom_call.1} parent=1 // pred_check
      _
    $region23: #{tpu_custom_call.1} parent=1 // pred_check_branch
      %612 = sbr.rel (0) target = $region25
    $region24: #{tpu_custom_call.1} parent=1 // pred_region
      %s614 = ssub.s32 32, 32
      %615 = vsyncadd [#allocation3], %s614
      %s617 = sshll.u32 [#allocation2], 4
      %s618 = int_to_ptr.vmem [resolvable:$true] %s617
      %620 = dma.vmem_to_hbm [thread:$0]  %s618, 32, %s5, [#allocation3]
    $region25: #{tpu_custom_call.1} parent=1 // pred_fallthru
      _
    // Predicated region
    $region26: #{tpu_custom_call.1} parent=1 // pred_check
      _
    $region27: #{tpu_custom_call.1} parent=1 // pred_check_branch
      %622 = sbr.rel (0) target = $region29
    $region28: #{tpu_custom_call.1} parent=1 // pred_region
      %623 = dma.done [#allocation3], 32
    $region29: #{tpu_custom_call.1} parent=1 // pred_fallthru
      _
    %624 = vsyncpa [#allocation3], 1

</llo_original>
